<compile_context>
chip_gen: v5e
topology: v5e:2x2
jax: 0.10.0
libtpu: 0.0.40
codegen_flags: <defaults>
</compile_context>

<pallas_src>
import jax
import jax.numpy as jnp
from jax.experimental import pallas as pl
from jax.experimental.pallas import tpu as pltpu

HIDDEN = 768        # BERT hidden size (fixed by nn.Linear(768, output_dim))
OUTPUT_DIM = 5      # default output_dim in the module
OUT_PAD = 128       # lane-dense padded output width


def _round_up(x, m):
    return ((x + m - 1) // m) * m


# ---------------------------------------------------------------------------
# Pallas kernel: classification head  y = x @ W + b   (lane-dense, padded N)
# ---------------------------------------------------------------------------
def _linear_head_kernel(x_ref, w_ref, b_ref, o_ref):
    # x_ref: (TB, 768) bf16|f32   w_ref: (768, 128) bf16
    # b_ref: (1, 128)  f32        o_ref: (TB, 128)  bf16
    x = x_ref[...].astype(jnp.bfloat16)   # no-op if already bf16; in-kernel VPU cast otherwise
    acc = jnp.dot(x, w_ref[...], preferred_element_type=jnp.float32)
    o_ref[...] = (acc + b_ref[...]).astype(o_ref.dtype)


def linear_head(cls_x, weight_t, bias, *, block_b=2048, min_pallas_batch=256,
                force_pallas=False):
    """cls_x: [B, 768] (bf16 or f32), weight_t: [768, 5], bias: [5] -> [B, 5] f32."""
    B, H = cls_x.shape
    assert H == HIDDEN
    assert block_b % 16 == 0

    # Small-batch bypass: a standalone Mosaic launch is pure overhead at tiny B;
    # let XLA fuse the 768x5 head with the producing op instead.
    if not force_pallas and B < min_pallas_batch:
        return (cls_x.astype(jnp.float32) @ weight_t.astype(jnp.float32)
                + bias.astype(jnp.float32))

    # Lane-dense padded head parameters (tiny; built host-side once).
    w_pad = jnp.zeros((HIDDEN, OUT_PAD), jnp.bfloat16)
    w_pad = w_pad.at[:, :OUTPUT_DIM].set(weight_t.astype(jnp.bfloat16))
    b_pad = jnp.zeros((1, OUT_PAD), jnp.float32)
    b_pad = b_pad.at[0, :OUTPUT_DIM].set(bias.astype(jnp.float32))

    # Batch tile: multiple of 16 (bf16 sublane packing), and at least 2 grid
    # steps whenever B > 16 so v7x's two TensorCores both get work.
    tb = min(block_b, max(16, _round_up(pl.cdiv(B, 2), 16)))
    b_rows = _round_up(B, tb)
    x = cls_x
    if b_rows != B:
        # Only fires for ragged B (typical power-of-two batches divide tb).
        x = jnp.pad(x, ((0, b_rows - B), (0, 0)))
    grid = (b_rows // tb,)

    # Honest VMEM budget: double-buffered activation/output blocks + resident
    # W/bias (no conservative x2 on the residents).
    x_bytes = x.dtype.itemsize
    per_step_bytes = (
        2 * tb * HIDDEN * x_bytes    # activation blocks, double-buffered
        + HIDDEN * OUT_PAD * 2       # resident W, bf16
        + 8 * OUT_PAD * 4            # bias tile (padded to (8,128))
        + 2 * tb * OUT_PAD * 2       # bf16 output blocks, double-buffered
    )
    vmem_limit = int(min(max(2 * per_step_bytes, 8 << 20), 32 << 20))

    cost = pl.CostEstimate(
        flops=2 * b_rows * HIDDEN * OUT_PAD,
        transcendentals=0,
        bytes_accessed=(b_rows * HIDDEN * x_bytes + HIDDEN * OUT_PAD * 2
                        + OUT_PAD * 4 + b_rows * OUT_PAD * 2),
    )

    out_padded = pl.pallas_call(
        _linear_head_kernel,
        out_shape=jax.ShapeDtypeStruct((b_rows, OUT_PAD), jnp.bfloat16),
        grid_spec=pl.GridSpec(
            grid=grid,
            in_specs=[
                pl.BlockSpec((tb, HIDDEN), lambda i: (i, 0)),       # activations
                pl.BlockSpec((HIDDEN, OUT_PAD), lambda i: (0, 0)),  # resident W
                pl.BlockSpec((1, OUT_PAD), lambda i: (0, 0)),       # resident bias
            ],
            out_specs=pl.BlockSpec((tb, OUT_PAD), lambda i: (i, 0)),
        ),
        compiler_params=pltpu.CompilerParams(
            dimension_semantics=("parallel",),
            vmem_limit_bytes=vmem_limit,
        ),
        cost_estimate=cost,
    )(x, w_pad, b_pad)

    # Slice off padded rows/columns and return f32 logits (tiny tensor).
    return out_padded[:B, :OUTPUT_DIM].astype(jnp.float32)


# ---------------------------------------------------------------------------
# Stand-in for the injected BERT backbone (`self.Model`).
# ---------------------------------------------------------------------------
# TODO(synk): the real BERT encoder is an external module passed to __init__
# (not defined in this file); represented by a deterministic embedding lookup
# + tanh producing (last_hidden [B,S,768], CLS_x [B,768]).  CLS_x is emitted
# in bf16 so the head kernel's dominant HBM read is already narrow (the cast
# fuses into the producing op instead of being a separate XLA pass).
def synthetic_backbone(token_ids, emb_table):
    last_hidden = jnp.tanh(emb_table[token_ids])            # [B, S, 768] f32
    cls_x = last_hidden[:, 0, :].astype(jnp.bfloat16)       # [B, 768] bf16
    return last_hidden, cls_x


# ---------------------------------------------------------------------------
# Full module forward.
# ---------------------------------------------------------------------------
def bert_classification_forward(token_ids, params, *, force_pallas=False):
    last_hidden, cls_x = synthetic_backbone(token_ids, params["emb_table"])
    del last_hidden  # unused by the head, matching the PyTorch forward
    return linear_head(cls_x, params["w_t"], params["b"],
                       force_pallas=force_pallas)


def init_params(key, vocab_size):
    k_emb, k_w, k_b = jax.random.split(key, 3)
    # nn.Linear(768, 5) default init: U(-1/sqrt(768), 1/sqrt(768))
    bound = 1.0 / jnp.sqrt(jnp.float32(HIDDEN))
    w = jax.random.uniform(k_w, (OUTPUT_DIM, HIDDEN), jnp.float32, -bound, bound)
    b = jax.random.uniform(k_b, (OUTPUT_DIM,), jnp.float32, -bound, bound)
    emb_table = jax.random.normal(k_emb, (vocab_size, HIDDEN), jnp.float32) * 0.02
    return {"emb_table": emb_table, "w_t": w.T, "b": b}


if __name__ == "__main__":
    key = jax.random.PRNGKey(0)
    k_params, k_tok1, k_tok2 = jax.random.split(key, 3)

    VOCAB = 100
    params = init_params(k_params, VOCAB)

    # (a) module-sized demo: B=2, S=8; force the Pallas head so the kernel runs.
    B, S = 2, 8
    token_ids = jax.random.randint(k_tok1, (B, S), 0, VOCAB, dtype=jnp.int32)
    out = bert_classification_forward(token_ids, params, force_pallas=True)
    out = jax.block_until_ready(out)
    assert out.shape == (B, OUTPUT_DIM), out.shape

    _, cls_x = synthetic_backbone(token_ids, params["emb_table"])
    ref = cls_x.astype(jnp.float32) @ params["w_t"] + params["b"]
    assert jnp.allclose(out, ref, atol=2e-2, rtol=2e-2), (out, ref)

    # (b) multi-tile path (grid >= 2 steps, no padding): B=32.
    B2 = 32
    token_ids2 = jax.random.randint(k_tok2, (B2, S), 0, VOCAB, dtype=jnp.int32)
    out2 = jax.block_until_ready(
        bert_classification_forward(token_ids2, params, force_pallas=True))
    _, cls2 = synthetic_backbone(token_ids2, params["emb_table"])
    ref2 = cls2.astype(jnp.float32) @ params["w_t"] + params["b"]
    assert out2.shape == (B2, OUTPUT_DIM), out2.shape
    assert jnp.allclose(out2, ref2, atol=2e-2, rtol=2e-2), (out2, ref2)

    # (c) default small-batch path falls back to plain XLA (fuses with producer).
    out_xla = jax.block_until_ready(bert_classification_forward(token_ids, params))
    assert jnp.allclose(out_xla, ref, atol=2e-2, rtol=2e-2), (out_xla, ref)

    print("KERNEL_OK")
</pallas_src>

<mosaic_0001>
module attributes {stable_mosaic.version = 11 : i64} {
  func.func @_linear_head_kernel(%arg0: i32, %arg1: memref<16x768xbf16, #tpu.memory_space<vmem>>, %arg2: memref<768x128xbf16, #tpu.memory_space<vmem>>, %arg3: memref<1x128xf32, #tpu.memory_space<vmem>>, %arg4: memref<16x128xbf16, #tpu.memory_space<vmem>>) attributes {dimension_semantics = [#tpu.dimension_semantics<parallel>], iteration_bounds = array<i64: 1>, scalar_prefetch = 0 : i64, scratch_operands = 0 : i64, tpu.core_type = #tpu.core_type<tc>, window_params = [{transform_indices = @transform_0, window_bounds = array<i64: 16, 768>}, {pipeline_mode = #tpu.pipeline_mode<synchronous>, transform_indices = @transform_1, window_bounds = array<i64: 768, 128>}, {pipeline_mode = #tpu.pipeline_mode<synchronous>, transform_indices = @transform_2, window_bounds = array<i64: 1, 128>}, {transform_indices = @transform_3, window_bounds = array<i64: 16, 128>}]} {
    %c0 = arith.constant 0 : index
    %c0_0 = arith.constant 0 : index
    %0 = vector.load %arg1[%c0, %c0_0] : memref<16x768xbf16, #tpu.memory_space<vmem>>, vector<16x768xbf16>
    %c0_1 = arith.constant 0 : index
    %c0_2 = arith.constant 0 : index
    %1 = vector.load %arg2[%c0_1, %c0_2] : memref<768x128xbf16, #tpu.memory_space<vmem>>, vector<768x128xbf16>
    %cst = arith.constant dense<0.000000e+00> : vector<16x128xf32>
    %2 = tpu.matmul %0, %1, %cst {dimension_numbers = #tpu.dot_dimension_numbers<[1], [0], [0], [1], [0, 0, 1, 1], [], []>} : vector<16x768xbf16>, vector<768x128xbf16>, vector<16x128xf32> -> vector<16x128xf32>
    %c0_3 = arith.constant 0 : index
    %c0_4 = arith.constant 0 : index
    %3 = vector.load %arg3[%c0_3, %c0_4] : memref<1x128xf32, #tpu.memory_space<vmem>>, vector<1x128xf32>
    %4 = vector.broadcast %3 : vector<1x128xf32> to vector<16x128xf32>
    %5 = arith.addf %2, %4 : vector<16x128xf32>
    %6 = arith.truncf %5 : vector<16x128xf32> to vector<16x128xbf16>
    %c0_5 = arith.constant 0 : index
    %c0_6 = arith.constant 0 : index
    %7 = vector.load %arg4[%c0_5, %c0_6] : memref<16x128xbf16, #tpu.memory_space<vmem>>, vector<16x128xbf16>
    tpu.vector_store %arg4[%c0_5, %c0_6], %6 {strides = array<i32>} : memref<16x128xbf16, #tpu.memory_space<vmem>>, vector<16x128xbf16>,
    return
  }
  func.func @transform_0(%arg0: i32) -> (i32, i32) {
    %c0_i32 = arith.constant 0 : i32
    %c0_i32_0 = arith.constant 0 : i32
    return %arg0, %c0_i32 : i32, i32
  }
  func.func @transform_1(%arg0: i32) -> (i32, i32) {
    %c0_i32 = arith.constant 0 : i32
    %c0_i32_0 = arith.constant 0 : i32
    %c0_i32_1 = arith.constant 0 : i32
    return %c0_i32, %c0_i32_0 : i32, i32
  }
  func.func @transform_2(%arg0: i32) -> (i32, i32) {
    %c0_i32 = arith.constant 0 : i32
    %c0_i32_0 = arith.constant 0 : i32
    %c0_i32_1 = arith.constant 0 : i32
    return %c0_i32, %c0_i32_0 : i32, i32
  }
  func.func @transform_3(%arg0: i32) -> (i32, i32) {
    %c0_i32 = arith.constant 0 : i32
    %c0_i32_0 = arith.constant 0 : i32
    return %arg0, %c0_i32 : i32, i32
  }
}

</mosaic_0001>

<llo_original>
// kernel: tpu_custom_call.1
$region0: #{tpu_custom_call.1}
  #allocation0 [shape = 'u32[]', space=smem, size = 0x4, offset = 0x4, fixed_abs, tag = 'smem constant byte address 0x4 - core index']
  #allocation1 [shape = 'u32[72,128]{1,0:T(1,128)}', space=vmem, size = 0x9000, scoped, tag = 'internal scratch']
  %s0 = inlined_call_operand.hbm [shape: bf16[16,768], index: 0, kind: input, shape index: {}]
  %s1 = inlined_call_operand.hbm [shape: bf16[768,128], index: 1, kind: input, shape index: {}]
  %s2 = inlined_call_operand.vmem [shape: f32[1,128], index: 2, kind: input, shape index: {}]
  %s3 = inlined_call_operand.hbm [shape: bf16[16,128], index: 3, kind: output, shape index: {}]
  %s4 = sld [smem:[#allocation0]]
  $region30: #{tpu_custom_call.1} parent=0
    _
  %s6 = ssub.s32 1, %s4
  %s7 = scalar_select 0, %s6, %s4
  $region1: #{tpu_custom_call.1} parent=0
    #allocation2 [shape = 'u8[24576]{0}', space=vmem, size = 0x6000, scoped, tag = 'input window, operand 0, single buffered']
    #allocation3 [shape = 's32[1]{0}', space=sflag, size = 0x4, scoped, tag = 'scoped memory for tpu_custom_call.1']
    #allocation4 [shape = 's32[1]{0}', space=sflag, size = 0x4, scoped, tag = 'scoped memory for tpu_custom_call.1']
    #allocation5 [shape = 'u8[196608]{0}', space=vmem, size = 0x30000, scoped, tag = 'input window, operand 1, single buffered']
    #allocation6 [shape = 's32[1]{0}', space=sflag, size = 0x4, scoped, tag = 'scoped memory for tpu_custom_call.1']
    #allocation7 [shape = 'u8[4096]{0}', space=vmem, size = 0x1000, scoped, tag = 'output window, operand 0, single buffered']
    %8 = vsyncpa [#allocation3], 0
    %9 = vsyncpa [#allocation6], 0
    %10 = vsyncpa [#allocation4], 0
    // Predicated region
    $region2: #{tpu_custom_call.1} parent=1 // pred_check
      _
    $region3: #{tpu_custom_call.1} parent=1 // pred_check_branch
      %12 = sbr.rel (0) target = $region5
    $region4: #{tpu_custom_call.1} parent=1 // pred_region
      %14 = vsyncadd [#allocation3], 0
      %s15 = sshll.u32 %s0, 4
      %s16 = int_to_ptr.hbm [resolvable:$true] %s15
      %s17 = sshll.u32 [#allocation2], 4
      %s18 = int_to_ptr.vmem [resolvable:$true] %s17
      %23 = dma.hbm_to_vmem [thread:$0]  %s16, 768, %s18, [#allocation3], 384, 384, 24
    $region5: #{tpu_custom_call.1} parent=1 // pred_fallthru
      _
    // Predicated region
    $region6: #{tpu_custom_call.1} parent=1 // pred_check
      _
    $region7: #{tpu_custom_call.1} parent=1 // pred_check_branch
      %25 = sbr.rel (0) target = $region9
    $region8: #{tpu_custom_call.1} parent=1 // pred_region
      %27 = vsyncadd [#allocation6], 0
      %s28 = sshll.u32 %s1, 4
      %s29 = int_to_ptr.hbm [resolvable:$true] %s28
      %s30 = sshll.u32 [#allocation5], 4
      %s31 = int_to_ptr.vmem [resolvable:$true] %s30
      %36 = dma.hbm_to_vmem [thread:$0]  %s29, 6144, %s31, [#allocation6], 64, 64, 4
    $region9: #{tpu_custom_call.1} parent=1 // pred_fallthru
      _
    // Predicated region
    $region10: #{tpu_custom_call.1} parent=1 // pred_check
      _
    $region11: #{tpu_custom_call.1} parent=1 // pred_check_branch
      %38 = sbr.rel (0) target = $region13
    $region12: #{tpu_custom_call.1} parent=1 // pred_region
      _
    $region13: #{tpu_custom_call.1} parent=1 // pred_fallthru
      _
    // Predicated region
    $region14: #{tpu_custom_call.1} parent=1 // pred_check
      _
    $region15: #{tpu_custom_call.1} parent=1 // pred_check_branch
      %40 = sbr.rel (0) target = $region17
    $region16: #{tpu_custom_call.1} parent=1 // pred_region
      %42 = dma.done [#allocation3], 768
    $region17: #{tpu_custom_call.1} parent=1 // pred_fallthru
      _
    // Predicated region
    $region18: #{tpu_custom_call.1} parent=1 // pred_check
      _
    $region19: #{tpu_custom_call.1} parent=1 // pred_check_branch
      %44 = sbr.rel (0) target = $region21
    $region20: #{tpu_custom_call.1} parent=1 // pred_region
      %46 = dma.done [#allocation6], 6144
    $region21: #{tpu_custom_call.1} parent=1 // pred_fallthru
      _
    %v47 = vld [vmem:[#allocation2] sm:$0xff]
    %v48 = vld [vmem:[#allocation2 + $0x8] sm:$0xff]
    %v49 = vld [vmem:[#allocation2 + $0x10] sm:$0xff]
    %v50 = vld [vmem:[#allocation2 + $0x18] sm:$0xff]
    %v51 = vld [vmem:[#allocation2 + $0x20] sm:$0xff]
    %v52 = vld [vmem:[#allocation2 + $0x28] sm:$0xff]
    %v53 = vld [vmem:[#allocation5] sm:$0xf]
    %v54 = vld [vmem:[#allocation5 + $0x4] sm:$0xf]
    %v55 = vld [vmem:[#allocation5 + $0x8] sm:$0xf]
    %v56 = vld [vmem:[#allocation5 + $0xc] sm:$0xf]
    %v57 = vld [vmem:[#allocation5 + $0x10] sm:$0xf]
    %v58 = vld [vmem:[#allocation5 + $0x14] sm:$0xf]
    %v59 = vld [vmem:[#allocation5 + $0x18] sm:$0xf]
    %v60 = vld [vmem:[#allocation5 + $0x1c] sm:$0xf]
    %v61 = vld [vmem:[#allocation5 + $0x20] sm:$0xf]
    %v62 = vld [vmem:[#allocation5 + $0x24] sm:$0xf]
    %v63 = vld [vmem:[#allocation5 + $0x28] sm:$0xf]
    %v64 = vld [vmem:[#allocation5 + $0x2c] sm:$0xf]
    %v65 = vld [vmem:[#allocation5 + $0x30] sm:$0xf]
    %v66 = vld [vmem:[#allocation5 + $0x34] sm:$0xf]
    %v67 = vld [vmem:[#allocation5 + $0x38] sm:$0xf]
    %v68 = vld [vmem:[#allocation5 + $0x3c] sm:$0xf]
    %v69 = vld [vmem:[#allocation5 + $0x40] sm:$0xf]
    %v70 = vld [vmem:[#allocation5 + $0x44] sm:$0xf]
    %v71 = vld [vmem:[#allocation5 + $0x48] sm:$0xf]
    %v72 = vld [vmem:[#allocation5 + $0x4c] sm:$0xf]
    %v73 = vld [vmem:[#allocation5 + $0x50] sm:$0xf]
    %v74 = vld [vmem:[#allocation5 + $0x54] sm:$0xf]
    %v75 = vld [vmem:[#allocation5 + $0x58] sm:$0xf]
    %v76 = vld [vmem:[#allocation5 + $0x5c] sm:$0xf]
    %v77 = vld [vmem:[#allocation5 + $0x60] sm:$0xf]
    %v78 = vld [vmem:[#allocation5 + $0x64] sm:$0xf]
    %v79 = vld [vmem:[#allocation5 + $0x68] sm:$0xf]
    %v80 = vld [vmem:[#allocation5 + $0x6c] sm:$0xf]
    %v81 = vld [vmem:[#allocation5 + $0x70] sm:$0xf]
    %v82 = vld [vmem:[#allocation5 + $0x74] sm:$0xf]
    %v83 = vld [vmem:[#allocation5 + $0x78] sm:$0xf]
    %v84 = vld [vmem:[#allocation5 + $0x7c] sm:$0xf]
    %v85 = vld [vmem:[#allocation5 + $0x80] sm:$0xf]
    %v86 = vld [vmem:[#allocation5 + $0x84] sm:$0xf]
    %v87 = vld [vmem:[#allocation5 + $0x88] sm:$0xf]
    %v88 = vld [vmem:[#allocation5 + $0x8c] sm:$0xf]
    %v89 = vld [vmem:[#allocation5 + $0x90] sm:$0xf]
    %v90 = vld [vmem:[#allocation5 + $0x94] sm:$0xf]
    %v91 = vld [vmem:[#allocation5 + $0x98] sm:$0xf]
    %v92 = vld [vmem:[#allocation5 + $0x9c] sm:$0xf]
    %v93 = vld [vmem:[#allocation5 + $0xa0] sm:$0xf]
    %v94 = vld [vmem:[#allocation5 + $0xa4] sm:$0xf]
    %v95 = vld [vmem:[#allocation5 + $0xa8] sm:$0xf]
    %v96 = vld [vmem:[#allocation5 + $0xac] sm:$0xf]
    %v97 = vld [vmem:[#allocation5 + $0xb0] sm:$0xf]
    %v98 = vld [vmem:[#allocation5 + $0xb4] sm:$0xf]
    %v99 = vld [vmem:[#allocation5 + $0xb8] sm:$0xf]
    %v100 = vld [vmem:[#allocation5 + $0xbc] sm:$0xf]
    %v101 = vld [vmem:[#allocation5 + $0xc0] sm:$0xf]
    %v102 = vld [vmem:[#allocation5 + $0xc4] sm:$0xf]
    %v103 = vld [vmem:[#allocation5 + $0xc8] sm:$0xf]
    %v104 = vld [vmem:[#allocation5 + $0xcc] sm:$0xf]
    %v105 = vld [vmem:[#allocation5 + $0xd0] sm:$0xf]
    %v106 = vld [vmem:[#allocation5 + $0xd4] sm:$0xf]
    %v107 = vld [vmem:[#allocation5 + $0xd8] sm:$0xf]
    %v108 = vld [vmem:[#allocation5 + $0xdc] sm:$0xf]
    %v109 = vld [vmem:[#allocation5 + $0xe0] sm:$0xf]
    %v110 = vld [vmem:[#allocation5 + $0xe4] sm:$0xf]
    %v111 = vld [vmem:[#allocation5 + $0xe8] sm:$0xf]
    %v112 = vld [vmem:[#allocation5 + $0xec] sm:$0xf]
    %v113 = vld [vmem:[#allocation5 + $0xf0] sm:$0xf]
    %v114 = vld [vmem:[#allocation5 + $0xf4] sm:$0xf]
    %v115 = vld [vmem:[#allocation5 + $0xf8] sm:$0xf]
    %v116 = vld [vmem:[#allocation5 + $0xfc] sm:$0xf]
    %v117 = vld [vmem:[#allocation5 + $0x100] sm:$0xf]
    %v118 = vld [vmem:[#allocation5 + $0x104] sm:$0xf]
    %v119 = vld [vmem:[#allocation5 + $0x108] sm:$0xf]
    %v120 = vld [vmem:[#allocation5 + $0x10c] sm:$0xf]
    %v121 = vld [vmem:[#allocation5 + $0x110] sm:$0xf]
    %v122 = vld [vmem:[#allocation5 + $0x114] sm:$0xf]
    %v123 = vld [vmem:[#allocation5 + $0x118] sm:$0xf]
    %v124 = vld [vmem:[#allocation5 + $0x11c] sm:$0xf]
    %v125 = vld [vmem:[#allocation5 + $0x120] sm:$0xf]
    %v126 = vld [vmem:[#allocation5 + $0x124] sm:$0xf]
    %v127 = vld [vmem:[#allocation5 + $0x128] sm:$0xf]
    %v128 = vld [vmem:[#allocation5 + $0x12c] sm:$0xf]
    %v129 = vld [vmem:[#allocation5 + $0x130] sm:$0xf]
    %v130 = vld [vmem:[#allocation5 + $0x134] sm:$0xf]
    %v131 = vld [vmem:[#allocation5 + $0x138] sm:$0xf]
    %v132 = vld [vmem:[#allocation5 + $0x13c] sm:$0xf]
    %v133 = vld [vmem:[#allocation5 + $0x140] sm:$0xf]
    %v134 = vld [vmem:[#allocation5 + $0x144] sm:$0xf]
    %v135 = vld [vmem:[#allocation5 + $0x148] sm:$0xf]
    %v136 = vld [vmem:[#allocation5 + $0x14c] sm:$0xf]
    %v137 = vld [vmem:[#allocation5 + $0x150] sm:$0xf]
    %v138 = vld [vmem:[#allocation5 + $0x154] sm:$0xf]
    %v139 = vld [vmem:[#allocation5 + $0x158] sm:$0xf]
    %v140 = vld [vmem:[#allocation5 + $0x15c] sm:$0xf]
    %v141 = vld [vmem:[#allocation5 + $0x160] sm:$0xf]
    %v142 = vld [vmem:[#allocation5 + $0x164] sm:$0xf]
    %v143 = vld [vmem:[#allocation5 + $0x168] sm:$0xf]
    %v144 = vld [vmem:[#allocation5 + $0x16c] sm:$0xf]
    %v145 = vld [vmem:[#allocation5 + $0x170] sm:$0xf]
    %v146 = vld [vmem:[#allocation5 + $0x174] sm:$0xf]
    %v147 = vld [vmem:[#allocation5 + $0x178] sm:$0xf]
    %v148 = vld [vmem:[#allocation5 + $0x17c] sm:$0xf]
    %v149 = vld [vmem:[%s2] sm:$0x1]
    %v151 = vperm.slane %v149, 0
    %v159 = vunpack.c.l.b16 %v47
    %v160 = vunpack.c.h.b16 %v47
    %v161 = vunpack.c.l.b16 %v48
    %v162 = vunpack.c.h.b16 %v48
    %v163 = vunpack.c.l.b16 %v49
    %v164 = vunpack.c.h.b16 %v49
    %v165 = vunpack.c.l.b16 %v50
    %v166 = vunpack.c.h.b16 %v50
    %v167 = vunpack.c.l.b16 %v51
    %v168 = vunpack.c.h.b16 %v51
    %v169 = vunpack.c.l.b16 %v52
    %v170 = vunpack.c.h.b16 %v52
    %v171 = vpack.c.b16 %v165, %v159
    %v172 = vpack.c.b16 %v166, %v160
    %v173 = vpack.c.b16 %v167, %v161
    %v174 = vpack.c.b16 %v168, %v162
    %v175 = vpack.c.b16 %v169, %v163
    %v176 = vpack.c.b16 %v170, %v164
    %v279 = vunpack.c.l.b16 %v53
    %v280 = vunpack.c.l.b16 %v54
    %v281 = vunpack.c.l.b16 %v55
    %v282 = vunpack.c.l.b16 %v56
    %v283 = vunpack.c.l.b16 %v57
    %v284 = vunpack.c.l.b16 %v58
    %v285 = vunpack.c.l.b16 %v59
    %v286 = vunpack.c.l.b16 %v60
    %v287 = vunpack.c.l.b16 %v61
    %v288 = vunpack.c.l.b16 %v62
    %v289 = vunpack.c.l.b16 %v63
    %v290 = vunpack.c.l.b16 %v64
    %v291 = vunpack.c.l.b16 %v65
    %v292 = vunpack.c.l.b16 %v66
    %v293 = vunpack.c.l.b16 %v67
    %v294 = vunpack.c.l.b16 %v68
    %v295 = vunpack.c.l.b16 %v69
    %v296 = vunpack.c.l.b16 %v70
    %v297 = vunpack.c.l.b16 %v71
    %v298 = vunpack.c.l.b16 %v72
    %v299 = vunpack.c.l.b16 %v73
    %v300 = vunpack.c.l.b16 %v74
    %v301 = vunpack.c.l.b16 %v75
    %v302 = vunpack.c.l.b16 %v76
    %v303 = vunpack.c.l.b16 %v77
    %v304 = vunpack.c.l.b16 %v78
    %v305 = vunpack.c.l.b16 %v79
    %v306 = vunpack.c.l.b16 %v80
    %v307 = vunpack.c.l.b16 %v81
    %v308 = vunpack.c.l.b16 %v82
    %v309 = vunpack.c.l.b16 %v83
    %v310 = vunpack.c.l.b16 %v84
    %v311 = vunpack.c.l.b16 %v85
    %v312 = vunpack.c.l.b16 %v86
    %v313 = vunpack.c.l.b16 %v87
    %v314 = vunpack.c.l.b16 %v88
    %v315 = vunpack.c.l.b16 %v89
    %v316 = vunpack.c.l.b16 %v90
    %v317 = vunpack.c.l.b16 %v91
    %v318 = vunpack.c.l.b16 %v92
    %v319 = vunpack.c.l.b16 %v93
    %v320 = vunpack.c.l.b16 %v94
    %v321 = vunpack.c.l.b16 %v95
    %v322 = vunpack.c.l.b16 %v96
    %v323 = vunpack.c.l.b16 %v97
    %v324 = vunpack.c.l.b16 %v98
    %v325 = vunpack.c.l.b16 %v99
    %v326 = vunpack.c.l.b16 %v100
    %v327 = vunpack.c.l.b16 %v101
    %v328 = vunpack.c.l.b16 %v102
    %v329 = vunpack.c.l.b16 %v103
    %v330 = vunpack.c.l.b16 %v104
    %v331 = vunpack.c.l.b16 %v105
    %v332 = vunpack.c.l.b16 %v106
    %v333 = vunpack.c.l.b16 %v107
    %v334 = vunpack.c.l.b16 %v108
    %v335 = vunpack.c.l.b16 %v109
    %v336 = vunpack.c.l.b16 %v110
    %v337 = vunpack.c.l.b16 %v111
    %v338 = vunpack.c.l.b16 %v112
    %v339 = vunpack.c.l.b16 %v113
    %v340 = vunpack.c.l.b16 %v114
    %v341 = vunpack.c.l.b16 %v115
    %v342 = vunpack.c.l.b16 %v116
    %v343 = vunpack.c.l.b16 %v117
    %v344 = vunpack.c.l.b16 %v118
    %v345 = vunpack.c.l.b16 %v119
    %v346 = vunpack.c.l.b16 %v120
    %v347 = vunpack.c.l.b16 %v121
    %v348 = vunpack.c.l.b16 %v122
    %v349 = vunpack.c.l.b16 %v123
    %v350 = vunpack.c.l.b16 %v124
    %v351 = vunpack.c.l.b16 %v125
    %v352 = vunpack.c.l.b16 %v126
    %v353 = vunpack.c.l.b16 %v127
    %v354 = vunpack.c.l.b16 %v128
    %v355 = vunpack.c.l.b16 %v129
    %v356 = vunpack.c.l.b16 %v130
    %v357 = vunpack.c.l.b16 %v131
    %v358 = vunpack.c.l.b16 %v132
    %v359 = vunpack.c.l.b16 %v133
    %v360 = vunpack.c.l.b16 %v134
    %v361 = vunpack.c.l.b16 %v135
    %v362 = vunpack.c.l.b16 %v136
    %v363 = vunpack.c.l.b16 %v137
    %v364 = vunpack.c.l.b16 %v138
    %v365 = vunpack.c.l.b16 %v139
    %v366 = vunpack.c.l.b16 %v140
    %v367 = vunpack.c.l.b16 %v141
    %v368 = vunpack.c.l.b16 %v142
    %v369 = vunpack.c.l.b16 %v143
    %v370 = vunpack.c.l.b16 %v144
    %v371 = vunpack.c.l.b16 %v145
    %v372 = vunpack.c.l.b16 %v146
    %v373 = vunpack.c.l.b16 %v147
    %v374 = vunpack.c.l.b16 %v148
    %v375 = vpack.c.b16 %v280, %v279
    %v376 = vpack.c.b16 %v282, %v281
    %v377 = vpack.c.b16 %v284, %v283
    %v378 = vpack.c.b16 %v286, %v285
    %v379 = vpack.c.b16 %v288, %v287
    %v380 = vpack.c.b16 %v290, %v289
    %v381 = vpack.c.b16 %v292, %v291
    %v382 = vpack.c.b16 %v294, %v293
    %v383 = vpack.c.b16 %v296, %v295
    %v384 = vpack.c.b16 %v298, %v297
    %v385 = vpack.c.b16 %v300, %v299
    %v386 = vpack.c.b16 %v302, %v301
    %v387 = vpack.c.b16 %v304, %v303
    %v388 = vpack.c.b16 %v306, %v305
    %v389 = vpack.c.b16 %v308, %v307
    %v390 = vpack.c.b16 %v310, %v309
    %v391 = vpack.c.b16 %v312, %v311
    %v392 = vpack.c.b16 %v314, %v313
    %v393 = vpack.c.b16 %v316, %v315
    %v394 = vpack.c.b16 %v318, %v317
    %v395 = vpack.c.b16 %v320, %v319
    %v396 = vpack.c.b16 %v322, %v321
    %v397 = vpack.c.b16 %v324, %v323
    %v398 = vpack.c.b16 %v326, %v325
    %v399 = vpack.c.b16 %v328, %v327
    %v400 = vpack.c.b16 %v330, %v329
    %v401 = vpack.c.b16 %v332, %v331
    %v402 = vpack.c.b16 %v334, %v333
    %v403 = vpack.c.b16 %v336, %v335
    %v404 = vpack.c.b16 %v338, %v337
    %v405 = vpack.c.b16 %v340, %v339
    %v406 = vpack.c.b16 %v342, %v341
    %v407 = vpack.c.b16 %v344, %v343
    %v408 = vpack.c.b16 %v346, %v345
    %v409 = vpack.c.b16 %v348, %v347
    %v410 = vpack.c.b16 %v350, %v349
    %v411 = vpack.c.b16 %v352, %v351
    %v412 = vpack.c.b16 %v354, %v353
    %v413 = vpack.c.b16 %v356, %v355
    %v414 = vpack.c.b16 %v358, %v357
    %v415 = vpack.c.b16 %v360, %v359
    %v416 = vpack.c.b16 %v362, %v361
    %v417 = vpack.c.b16 %v364, %v363
    %v418 = vpack.c.b16 %v366, %v365
    %v419 = vpack.c.b16 %v368, %v367
    %v420 = vpack.c.b16 %v370, %v369
    %v421 = vpack.c.b16 %v372, %v371
    %v422 = vpack.c.b16 %v374, %v373
    %471 = vmatpush.bf16.msra.mxu0 %v382
    %472 = vmatpush.bf16.msra.mxu0 %v381
    %473 = vmatpush.bf16.msra.mxu0 %v380
    %474 = vmatpush.bf16.msra.mxu0 %v379
    %475 = vmatpush.bf16.msra.mxu0 %v378
    %476 = vmatpush.bf16.msra.mxu0 %v377
    %477 = vmatpush.bf16.msra.mxu0 %v376
    %478 = vmatpush.bf16.msra.mxu0 %v375
    %479 = vmatmul.bf16.gmra.mxu0 %v171
    %v480 = vpop.f32.mrf.mxu0
    %v481 = vadd.f32 %v151, %v480
    %v482 = vpop.f32.mrf.mxu0
    %v483 = vadd.f32 %v151, %v482
    %484 = vdwg.mxu0
    %485 = vmatpush.bf16.msra.mxu0 %v390
    %486 = vmatpush.bf16.msra.mxu0 %v389
    %487 = vmatpush.bf16.msra.mxu0 %v388
    %488 = vmatpush.bf16.msra.mxu0 %v387
    %489 = vmatpush.bf16.msra.mxu0 %v386
    %490 = vmatpush.bf16.msra.mxu0 %v385
    %491 = vmatpush.bf16.msra.mxu0 %v384
    %492 = vmatpush.bf16.msra.mxu0 %v383
    %493 = vmatmul.bf16.gmra.mxu0 %v172
    %v494 = vpop.f32.mrf.mxu0
    %v495 = vadd.f32 %v481, %v494
    %v496 = vpop.f32.mrf.mxu0
    %v497 = vadd.f32 %v483, %v496
    %498 = vdwg.mxu0
    %499 = vmatpush.bf16.msra.mxu0 %v398
    %500 = vmatpush.bf16.msra.mxu0 %v397
    %501 = vmatpush.bf16.msra.mxu0 %v396
    %502 = vmatpush.bf16.msra.mxu0 %v395
    %503 = vmatpush.bf16.msra.mxu0 %v394
    %504 = vmatpush.bf16.msra.mxu0 %v393
    %505 = vmatpush.bf16.msra.mxu0 %v392
    %506 = vmatpush.bf16.msra.mxu0 %v391
    %507 = vmatmul.bf16.gmra.mxu0 %v173
    %v508 = vpop.f32.mrf.mxu0
    %v509 = vadd.f32 %v495, %v508
    %v510 = vpop.f32.mrf.mxu0
    %v511 = vadd.f32 %v497, %v510
    %512 = vdwg.mxu0
    %513 = vmatpush.bf16.msra.mxu0 %v406
    %514 = vmatpush.bf16.msra.mxu0 %v405
    %515 = vmatpush.bf16.msra.mxu0 %v404
    %516 = vmatpush.bf16.msra.mxu0 %v403
    %517 = vmatpush.bf16.msra.mxu0 %v402
    %518 = vmatpush.bf16.msra.mxu0 %v401
    %519 = vmatpush.bf16.msra.mxu0 %v400
    %520 = vmatpush.bf16.msra.mxu0 %v399
    %521 = vmatmul.bf16.gmra.mxu0 %v174
    %v522 = vpop.f32.mrf.mxu0
    %v523 = vadd.f32 %v509, %v522
    %v524 = vpop.f32.mrf.mxu0
    %v525 = vadd.f32 %v511, %v524
    %526 = vdwg.mxu0
    %527 = vmatpush.bf16.msra.mxu0 %v414
    %528 = vmatpush.bf16.msra.mxu0 %v413
    %529 = vmatpush.bf16.msra.mxu0 %v412
    %530 = vmatpush.bf16.msra.mxu0 %v411
    %531 = vmatpush.bf16.msra.mxu0 %v410
    %532 = vmatpush.bf16.msra.mxu0 %v409
    %533 = vmatpush.bf16.msra.mxu0 %v408
    %534 = vmatpush.bf16.msra.mxu0 %v407
    %535 = vmatmul.bf16.gmra.mxu0 %v175
    %v536 = vpop.f32.mrf.mxu0
    %v537 = vadd.f32 %v523, %v536
    %v538 = vpop.f32.mrf.mxu0
    %v539 = vadd.f32 %v525, %v538
    %540 = vdwg.mxu0
    %541 = vmatpush.bf16.msra.mxu0 %v422
    %542 = vmatpush.bf16.msra.mxu0 %v421
    %543 = vmatpush.bf16.msra.mxu0 %v420
    %544 = vmatpush.bf16.msra.mxu0 %v419
    %545 = vmatpush.bf16.msra.mxu0 %v418
    %546 = vmatpush.bf16.msra.mxu0 %v417
    %547 = vmatpush.bf16.msra.mxu0 %v416
    %548 = vmatpush.bf16.msra.mxu0 %v415
    %549 = vmatmul.bf16.gmra.mxu0 %v176
    %v550 = vpop.f32.mrf.mxu0
    %v551 = vadd.f32 %v537, %v550
    %v552 = vpop.f32.mrf.mxu0
    %v553 = vadd.f32 %v539, %v552
    %554 = vdwg.mxu0
    %v555 = vpack.c.bf16 %v551, %v551
    %v556 = vpack.c.bf16 %v553, %v553
    %557 = vst [vmem:[#allocation7] sm:$0xf] %v555
    %558 = vst [vmem:[#allocation7 + $0x4] sm:$0xf] %v556
    // Predicated region
    $region22: #{tpu_custom_call.1} parent=1 // pred_check
      _
    $region23: #{tpu_custom_call.1} parent=1 // pred_check_branch
      %560 = sbr.rel (0) target = $region25
    $region24: #{tpu_custom_call.1} parent=1 // pred_region
      %562 = vsyncadd [#allocation4], 0
      %s563 = sshll.u32 [#allocation7], 4
      %s564 = int_to_ptr.vmem [resolvable:$true] %s563
      %s565 = sshll.u32 %s3, 4
      %s566 = int_to_ptr.hbm [resolvable:$true] %s565
      %571 = dma.vmem_to_hbm [thread:$0]  %s564, 128, %s566, [#allocation4], 64, 64, 4
    $region25: #{tpu_custom_call.1} parent=1 // pred_fallthru
      _
    // Predicated region
    $region26: #{tpu_custom_call.1} parent=1 // pred_check
      _
    $region27: #{tpu_custom_call.1} parent=1 // pred_check_branch
      %573 = sbr.rel (0) target = $region29
    $region28: #{tpu_custom_call.1} parent=1 // pred_region
      %575 = dma.done [#allocation4], 128
    $region29: #{tpu_custom_call.1} parent=1 // pred_fallthru
      _
    %576 = vsyncpa [#allocation3], 1
    %577 = vsyncpa [#allocation6], 1
    %578 = vsyncpa [#allocation4], 1

</llo_original>
